<compile_context>
chip_gen: v5e
topology: v5e:2x2
jax: 0.10.0
libtpu: 0.0.40
codegen_flags: <defaults>
</compile_context>

<pallas_src>
import functools

import jax
import jax.numpy as jnp
from jax.experimental import pallas as pl
from jax.experimental.pallas import tpu as pltpu


def _copy_kernel(x_ref, o_ref):
    # Stack is a .view(): identity on the underlying contiguous buffer.
    o_ref[...] = x_ref[...]


_LANE_CANDIDATES = (2048, 1024, 512, 256, 128)   # lane-dense widths (multiples of 128)
_TARGET_TILE_BYTES = 2 * 1024 * 1024             # ~2 MiB per block; 2x2x2 MiB << 32 MiB VMEM


def _tiled_copy(flat):
    """Stream a 1-D contiguous buffer HBM->VMEM->HBM with lane/sublane-dense blocks."""
    total = flat.shape[0]
    itemsize = jnp.dtype(flat.dtype).itemsize

    lane = next((c for c in _LANE_CANDIDATES if total % c == 0), None)
    if lane is None:
        # Ragged flat size (not a multiple of 128): pad to lane width, copy,
        # slice back.  The pad/slice are cheap XLA ops; keeps the kernel legal.
        pad = (-total) % 128
        padded = jnp.pad(flat, (0, pad))
        return _tiled_copy(padded)[:total]

    rows = total // lane
    x2d = flat.reshape(rows, lane)

    if rows < 8:
        # Sublane dim equal to the full array dim is always a legal block.
        row_tile = rows
    else:
        # Multiple of 8 sublanes, sized so one block is ~_TARGET_TILE_BYTES.
        row_tile = max(8, min(rows, _TARGET_TILE_BYTES // (lane * itemsize)))
        row_tile = (row_tile // 8) * 8

    grid = (pl.cdiv(rows, row_tile),)

    copied = pl.pallas_call(
        _copy_kernel,
        out_shape=jax.ShapeDtypeStruct((rows, lane), flat.dtype),
        grid_spec=pltpu.PrefetchScalarGridSpec(
            num_scalar_prefetch=0,
            grid=grid,
            in_specs=[pl.BlockSpec((row_tile, lane), lambda i: (i, 0))],
            out_specs=pl.BlockSpec((row_tile, lane), lambda i: (i, 0)),
        ),
        compiler_params=pltpu.CompilerParams(
            dimension_semantics=("parallel",),
            vmem_limit_bytes=32 * 1024 * 1024,
        ),
        cost_estimate=pl.CostEstimate(
            flops=0, transcendentals=0, bytes_accessed=2 * total * itemsize
        ),
        # Output is the (donated) input buffer: lets XLA elide the HBM round-trip.
        input_output_aliases={0: 0},
    )(x2d)

    return copied.reshape(total)


@functools.partial(jax.jit, static_argnums=(1, 2, 3))
def stack_forward(x, channels, height, width):
    """Pallas equivalent of Stack(channels, height, width).forward(x)."""
    B = x.shape[0]
    total = B * channels * height * width
    flat = x.reshape(total)           # metadata-only (contiguous), like .view()
    out_flat = _tiled_copy(flat)      # identity streaming copy through the kernel
    # .view() in PyTorch is a zero-copy metadata change; this reshape is the
    # same metadata-only glue applied to the kernel's (aliased) output buffer.
    return out_flat.reshape(B, channels, height, width)


if __name__ == "__main__":
    # Small shapes consistent with the module: batch=2, channels=4, 16x16 spatial.
    B, C, H, W = 2, 4, 16, 16

    key = jax.random.PRNGKey(0)
    x = jax.random.normal(key, (B, C * H * W), dtype=jnp.float32)

    # Reference computed before the (aliasing) kernel call.
    ref = x.reshape(B, C, H, W)

    y = stack_forward(x, C, H, W)
    y = jax.block_until_ready(y)

    assert y.shape == (B, C, H, W)
    assert y.dtype == x.dtype
    assert jnp.array_equal(y, ref), "Pallas Stack output mismatch"

    print("KERNEL_OK")
</pallas_src>

<mosaic_0001>
module attributes {stable_mosaic.version = 11 : i64} {
  func.func @_copy_kernel(%arg0: i32, %arg1: memref<1x2048xf32, #tpu.memory_space<vmem>>, %arg2: memref<1x2048xf32, #tpu.memory_space<vmem>>) attributes {dimension_semantics = [#tpu.dimension_semantics<parallel>], iteration_bounds = array<i64: 1>, scalar_prefetch = 0 : i64, scratch_operands = 0 : i64, tpu.core_type = #tpu.core_type<tc>, window_params = [{transform_indices = @transform_0, window_bounds = array<i64: 1, 2048>}, {transform_indices = @transform_1, window_bounds = array<i64: 1, 2048>}]} {
    %c0 = arith.constant 0 : index
    %c0_0 = arith.constant 0 : index
    %0 = vector.load %arg1[%c0, %c0_0] : memref<1x2048xf32, #tpu.memory_space<vmem>>, vector<1x2048xf32>
    %c0_1 = arith.constant 0 : index
    %c0_2 = arith.constant 0 : index
    %1 = vector.load %arg2[%c0_1, %c0_2] : memref<1x2048xf32, #tpu.memory_space<vmem>>, vector<1x2048xf32>
    tpu.vector_store %arg2[%c0_1, %c0_2], %0 {strides = array<i32>} : memref<1x2048xf32, #tpu.memory_space<vmem>>, vector<1x2048xf32>,
    return
  }
  func.func @transform_0(%arg0: i32) -> (i32, i32) {
    %c0_i32 = arith.constant 0 : i32
    %c0_i32_0 = arith.constant 0 : i32
    return %arg0, %c0_i32 : i32, i32
  }
  func.func @transform_1(%arg0: i32) -> (i32, i32) {
    %c0_i32 = arith.constant 0 : i32
    %c0_i32_0 = arith.constant 0 : i32
    return %arg0, %c0_i32 : i32, i32
  }
}

</mosaic_0001>

<llo_original>
// kernel: stack_forward.1
$region0: #{stack_forward.1}
  #allocation0 [shape = 'u32[]', space=smem, size = 0x4, offset = 0x4, fixed_abs, tag = 'smem constant byte address 0x4 - core index']
  #allocation1 [shape = 'u32[72,128]{1,0:T(1,128)}', space=vmem, size = 0x9000, scoped, tag = 'internal scratch']
  %s0 = inlined_call_operand.vmem [shape: f32[1,2048], index: 0, kind: input, shape index: {}, may-alias: {0,1}]
  %s1 = inlined_call_operand.vmem [shape: f32[1,2048], index: 1, kind: output, shape index: {}, may-alias: {0,1}]
  %s2 = sld [smem:[#allocation0]]
  $region14: #{stack_forward.1} parent=0
    _
  %s4 = ssub.s32 1, %s2
  %s5 = scalar_select 0, %s4, %s2
  // Predicated region
  $region2: #{stack_forward.1} parent=0 // pred_check
    _
  $region3: #{stack_forward.1} parent=0 // pred_check_branch
    %7 = sbr.rel (0) target = $region5
  $region4: #{stack_forward.1} parent=0 // pred_region
    _
  $region5: #{stack_forward.1} parent=0 // pred_fallthru
    _
  %v8 = vld [vmem:[%s0] sm:$0xff]
  %v9 = vld [vmem:[%s0 + $0x8] sm:$0xff]
  %10 = vst [vmem:[%s1] sm:$0xff] %v8
  %11 = vst [vmem:[%s1 + $0x8] sm:$0xff] %v9
  // Predicated region
  $region6: #{stack_forward.1} parent=0 // pred_check
    _
  $region7: #{stack_forward.1} parent=0 // pred_check_branch
    %13 = sbr.rel (0) target = $region9
  $region8: #{stack_forward.1} parent=0 // pred_region
    _
  $region9: #{stack_forward.1} parent=0 // pred_fallthru
    _
  // Predicated region
  $region10: #{stack_forward.1} parent=0 // pred_check
    _
  $region11: #{stack_forward.1} parent=0 // pred_check_branch
    %15 = sbr.rel (0) target = $region13
  $region12: #{stack_forward.1} parent=0 // pred_region
    _
  $region13: #{stack_forward.1} parent=0 // pred_fallthru
    _

</llo_original>
